<compile_context>
chip_gen: v6e
topology: v6e:2x2x1
jax: 0.10.0
libtpu: 0.0.40
codegen_flags: <defaults>
</compile_context>

<pallas_src>
import functools

import jax
import jax.numpy as jnp
from jax.experimental import pallas as pl
from jax.experimental.pallas import tpu as pltpu


_LANE = 128          # TPU lane width (VMEM tiles pad the last dim up to this)
_MAX_TILE_N = 4096   # upper bound on rows per grid step


def _round_up(x, m):
    return (x + m - 1) // m * m


def _default_vmem_limit():
    """Scoped-VMEM budget: half of physical, capped at 64 MiB.

    Resolves to 64 MiB on v5e/v6e (128 MiB physical) and 32 MiB on v7x (64 MiB / TC).
    """
    try:
        cap = int(pltpu.get_tpu_info().vmem_capacity_bytes)
    except Exception:
        cap = 128 * 1024 * 1024
    return int(min(64 * 1024 * 1024, cap // 2))


_VMEM_LIMIT = _default_vmem_limit()


def _pick_tile_n(n, cin, cout, elem_bytes, has_xyz):
    """Rows per grid step: as big as VMEM allows, but >= 2 balanced tiles (v7x megacore)."""
    def vmem_row_bytes(c, b):
        # a (tile_n, c) block occupies round_up(c, 128) lanes per row in VMEM
        return _round_up(max(int(c), 1), _LANE) * b

    per_row = 2 * vmem_row_bytes(cin, elem_bytes)       # data stream (double-buffered)
    if has_xyz:
        per_row += 2 * vmem_row_bytes(3, elem_bytes)    # xyz stream (double-buffered)
    per_row += 2 * vmem_row_bytes(cout, elem_bytes)     # output stream (double-buffered)
    per_row += 2 * vmem_row_bytes(cout, 4)              # in-body f32 y + headroom

    budget = _VMEM_LIMIT // 2                           # room for weights / compiler temps
    cap = budget // max(per_row, 1)
    cap = max(8, min(_MAX_TILE_N, (cap // 8) * 8))

    if n <= 16:
        return n                                        # single full-extent block (legal)
    # >= 2 balanced tiles so dimension_semantics=("parallel",) pays off on v7x's 2 TCs.
    return min(cap, _round_up(pl.cdiv(n, 2), 8))


def _y_tile(data_ref, xyz_ref, w_ref, wx_ref):
    """f32 [tile_n, cout] linear output for the current tile (MXU + 3 VPU rank-1 FMAs)."""
    y = jnp.dot(data_ref[...], w_ref[...], preferred_element_type=jnp.float32)
    if xyz_ref is not None:
        xyz = xyz_ref[...].astype(jnp.float32)          # [tile_n, 3]
        wx = wx_ref[...].astype(jnp.float32)            # [3, cout]
        for k in range(3):                              # K=3 would badly underfill the MXU
            y = y + xyz[:, k:k + 1] * wx[k:k + 1, :]
    return y


def _stats_kernel(*refs, has_xyz, n_valid):
    """Pass 1: per-tile per-channel sum / sum-of-squares of y (no y writeback)."""
    if has_xyz:
        data_ref, xyz_ref, w_ref, wx_ref, stats_ref = refs
    else:
        data_ref, w_ref, stats_ref = refs
        xyz_ref = wx_ref = None

    y = _y_tile(data_ref, xyz_ref, w_ref, wx_ref)
    tile_n = y.shape[0]

    # Mask rows past the true N: the ragged last tile's VMEM rows are undefined garbage
    # and must not pollute the batch statistics (select is NaN-safe).
    row = pl.program_id(0) * tile_n + jax.lax.broadcasted_iota(jnp.int32, (tile_n, 1), 0)
    ym = jnp.where(row < n_valid, y, 0.0)

    s1 = jnp.sum(ym, axis=0, keepdims=True)             # [1, cout]
    s2 = jnp.sum(ym * ym, axis=0, keepdims=True)        # [1, cout]
    stats_ref[...] = jnp.concatenate([s1, s2], axis=0)[None]   # [1, 2, cout]


def _fused_out_kernel(*refs, has_xyz, relu):
    """Pass 2: recompute y for the tile, apply folded BN scale/shift (+ReLU), store."""
    if has_xyz:
        data_ref, xyz_ref, w_ref, wx_ref, scale_ref, shift_ref, out_ref = refs
    else:
        data_ref, w_ref, scale_ref, shift_ref, out_ref = refs
        xyz_ref = wx_ref = None

    y = _y_tile(data_ref, xyz_ref, w_ref, wx_ref)
    out = y * scale_ref[...] + shift_ref[...]
    if relu:
        out = jnp.maximum(out, 0.0)
    out_ref[...] = out.astype(out_ref.dtype)


@functools.partial(jax.jit, static_argnames=("cat_xyz", "relu", "eps"))
def _point_lbr_impl(xyz, data, weight, gamma, beta, *, cat_xyz, relu, eps):
    bs, npoint, cin = data.shape
    cout = weight.shape[0]
    n = bs * npoint

    data2d = data.reshape(n, cin)                        # channels-last -> channels on lanes
    elem_bytes = jnp.dtype(data.dtype).itemsize

    tile_n = _pick_tile_n(n, cin, cout, elem_bytes, cat_xyz)
    num_tiles = pl.cdiv(n, tile_n)

    # Weight is consumed pre-transposed ([Cin, Cout]) so the kernel runs a plain
    # [M,K]x[K,N] dot with no in-kernel weight transpose.
    # TODO(synk): in a real model, transpose/cast the weight once at parameter-load time.
    w_d = weight[:, :cin].T.astype(data2d.dtype)         # [cin, cout]
    gamma_f = gamma.astype(jnp.float32).reshape(1, cout)
    beta_f = beta.astype(jnp.float32).reshape(1, cout)

    in_arrays = [data2d]
    in_specs = [pl.BlockSpec((tile_n, cin), lambda t: (t, 0))]
    if cat_xyz:
        xyz2d = xyz.reshape(n, 3).astype(data2d.dtype)
        w_x = weight[:, cin:cin + 3].T.astype(data2d.dtype)   # [3, cout]
        in_arrays += [xyz2d, w_d, w_x]
        in_specs += [
            pl.BlockSpec((tile_n, 3), lambda t: (t, 0)),
            pl.BlockSpec((cin, cout), lambda t: (0, 0)),
            pl.BlockSpec((3, cout), lambda t: (0, 0)),
        ]
    else:
        in_arrays += [w_d]
        in_specs += [pl.BlockSpec((cin, cout), lambda t: (0, 0))]

    compiler_params = pltpu.CompilerParams(
        dimension_semantics=("parallel",),
        vmem_limit_bytes=_VMEM_LIMIT)

    # ---- Pass 1: per-tile channel sum / sumsq (tiny output; no y intermediate) ----
    stats = pl.pallas_call(
        functools.partial(_stats_kernel, has_xyz=cat_xyz, n_valid=n),
        out_shape=jax.ShapeDtypeStruct((num_tiles, 2, cout), jnp.float32),
        grid_spec=pltpu.PrefetchScalarGridSpec(
            num_scalar_prefetch=0,
            grid=(num_tiles,),
            in_specs=in_specs,
            out_specs=pl.BlockSpec((1, 2, cout), lambda t: (t, 0, 0)),
        ),
        compiler_params=compiler_params,
    )(*in_arrays)

    # ---- Tiny [1, cout] glue: reduce partials, fold BN (biased var) into scale/shift ----
    # NOTE: E[y^2]-E[y]^2 in f32 -- fine at ~1e-3 tolerances; switch to mean-shifted
    # per-tile sums if the activation mean/std ratio ever becomes extreme.
    sums = jnp.sum(stats, axis=0)                        # [2, cout]
    mean = (sums[0] / n).reshape(1, cout)
    var = jnp.maximum(sums[1] / n - mean * mean, 0.0)
    scale = gamma_f * jax.lax.rsqrt(var + eps)
    shift = beta_f - mean * scale

    # ---- Pass 2: recompute y per tile, scale/shift(+ReLU), exact-shape output ----
    out2d = pl.pallas_call(
        functools.partial(_fused_out_kernel, has_xyz=cat_xyz, relu=relu),
        out_shape=jax.ShapeDtypeStruct((n, cout), data.dtype),
        grid_spec=pltpu.PrefetchScalarGridSpec(
            num_scalar_prefetch=0,
            grid=(num_tiles,),
            in_specs=in_specs + [
                pl.BlockSpec((1, cout), lambda t: (0, 0)),
                pl.BlockSpec((1, cout), lambda t: (0, 0)),
            ],
            out_specs=pl.BlockSpec((tile_n, cout), lambda t: (t, 0)),
        ),
        compiler_params=compiler_params,
    )(*in_arrays, scale, shift)

    return out2d.reshape(bs, npoint, cout)


def point_lbr(xyz, data, weight, gamma, beta, *, cat_xyz=False, relu=True, eps=1e-5):
    """JAX wrapper mirroring PointLBR.forward((xyz, data)) with norm='bn'.

    xyz    : [BS, npoint, 3]
    data   : [BS, npoint, Cin]
    weight : [Cout, Cin(+3 if cat_xyz)]  (PyTorch nn.Linear layout, bias-free since norm='bn')
    gamma  : [Cout]  BatchNorm1d weight
    beta   : [Cout]  BatchNorm1d bias
    returns (xyz, out) with out: [BS, npoint, Cout]
    """
    out = _point_lbr_impl(xyz, data, weight, gamma, beta,
                          cat_xyz=cat_xyz, relu=relu, eps=float(eps))
    return xyz, out


def _reference(xyz, data, weight, gamma, beta, *, cat_xyz=False, relu=True, eps=1e-5):
    """Pure-JAX reference of the same forward (for a sanity check)."""
    if cat_xyz:
        data = jnp.concatenate([data, xyz], axis=-1)
    y = jnp.einsum("bnc,oc->bno", data, weight)
    mean = jnp.mean(y, axis=(0, 1), keepdims=True)
    var = jnp.mean((y - mean) ** 2, axis=(0, 1), keepdims=True)
    y = (y - mean) / jnp.sqrt(var + eps) * gamma + beta
    if relu:
        y = jnp.maximum(y, 0.0)
    return xyz, y


if __name__ == "__main__":
    key = jax.random.PRNGKey(0)
    k_xyz, k_data, k_w, k_w2, k_g, k_b = jax.random.split(key, 6)

    BS, NPOINT, CIN, COUT = 2, 16, 32, 64

    xyz = jax.random.normal(k_xyz, (BS, NPOINT, 3), dtype=jnp.float32)
    data = jax.random.normal(k_data, (BS, NPOINT, CIN), dtype=jnp.float32)

    # nn.Linear-style uniform weight; non-trivial BN affine parameters.
    bound = 1.0 / (CIN ** 0.5)
    weight = jax.random.uniform(k_w, (COUT, CIN), minval=-bound, maxval=bound,
                                dtype=jnp.float32)
    gamma = jax.random.uniform(k_g, (COUT,), minval=0.5, maxval=1.5, dtype=jnp.float32)
    beta = jax.random.uniform(k_b, (COUT,), minval=-0.5, maxval=0.5, dtype=jnp.float32)

    # cat_xyz=False path
    xyz_out, out = point_lbr(xyz, data, weight, gamma, beta, cat_xyz=False, relu=True)
    out = jax.block_until_ready(out)
    _, ref = _reference(xyz, data, weight, gamma, beta, cat_xyz=False, relu=True)
    assert out.shape == (BS, NPOINT, COUT)
    assert jnp.allclose(out, ref, atol=1e-3, rtol=1e-3), "mismatch vs reference"

    # cat_xyz=True path (weight has 3 extra input columns for the concatenated xyz)
    bound2 = 1.0 / ((CIN + 3) ** 0.5)
    weight2 = jax.random.uniform(k_w2, (COUT, CIN + 3), minval=-bound2, maxval=bound2,
                                 dtype=jnp.float32)
    _, out2 = point_lbr(xyz, data, weight2, gamma, beta, cat_xyz=True, relu=True)
    out2 = jax.block_until_ready(out2)
    _, ref2 = _reference(xyz, data, weight2, gamma, beta, cat_xyz=True, relu=True)
    assert out2.shape == (BS, NPOINT, COUT)
    assert jnp.allclose(out2, ref2, atol=1e-3, rtol=1e-3), "mismatch vs reference (cat_xyz)"

    print("KERNEL_OK")
</pallas_src>

<mosaic_0001>
module attributes {stable_mosaic.version = 11 : i64} {
  func.func @_stats_kernel(%arg0: i32, %arg1: memref<16x32xf32, #tpu.memory_space<vmem>>, %arg2: memref<32x64xf32, #tpu.memory_space<vmem>>, %arg3: memref<1x2x64xf32, #tpu.memory_space<vmem>>) attributes {dimension_semantics = [#tpu.dimension_semantics<parallel>], iteration_bounds = array<i64: 2>, scalar_prefetch = 0 : i64, scratch_operands = 0 : i64, tpu.core_type = #tpu.core_type<tc>, window_params = [{transform_indices = @transform_0, window_bounds = array<i64: 16, 32>}, {pipeline_mode = #tpu.pipeline_mode<synchronous>, transform_indices = @transform_1, window_bounds = array<i64: 32, 64>}, {transform_indices = @transform_2, window_bounds = array<i64: 1, 2, 64>}]} {
    %c0 = arith.constant 0 : index
    %c0_0 = arith.constant 0 : index
    %0 = vector.load %arg1[%c0, %c0_0] : memref<16x32xf32, #tpu.memory_space<vmem>>, vector<16x32xf32>
    %c0_1 = arith.constant 0 : index
    %c0_2 = arith.constant 0 : index
    %1 = vector.load %arg2[%c0_1, %c0_2] : memref<32x64xf32, #tpu.memory_space<vmem>>, vector<32x64xf32>
    %cst = arith.constant dense<0.000000e+00> : vector<16x64xf32>
    %2 = tpu.matmul %0, %1, %cst {dimension_numbers = #tpu.dot_dimension_numbers<[1], [0], [0], [1], [0, 0, 1, 1], [], []>} : vector<16x32xf32>, vector<32x64xf32>, vector<16x64xf32> -> vector<16x64xf32>
    %c16_i32 = arith.constant 16 : i32
    %3 = arith.muli %arg0, %c16_i32 : i32
    %4 = tpu.iota {dimensions = array<i32: 0>} : vector<16x1xi32>
    %5 = vector.broadcast %3 : i32 to vector<16x1xi32>
    %6 = arith.addi %5, %4 : vector<16x1xi32>
    %c32_i32 = arith.constant 32 : i32
    %7 = vector.broadcast %c32_i32 : i32 to vector<16x1xi32>
    %8 = arith.cmpi slt, %6, %7 : vector<16x1xi32>
    %cst_3 = arith.constant 0.000000e+00 : f32
    %9 = vector.shape_cast %8 : vector<16x1xi1> to vector<16x1xi1>
    %10 = vector.broadcast %9 : vector<16x1xi1> to vector<16x64xi1>
    %11 = vector.broadcast %cst_3 : f32 to vector<16x64xf32>
    %12 = arith.select %10, %2, %11 : vector<16x64xi1>, vector<16x64xf32>
    %cst_4 = arith.constant dense<0.000000e+00> : vector<64xf32>
    %13 = vector.multi_reduction <add>, %12, %cst_4 [0] : vector<16x64xf32> to vector<64xf32>
    %14 = vector.shape_cast %13 : vector<64xf32> to vector<1x64xf32>
    %15 = arith.mulf %12, %12 : vector<16x64xf32>
    %cst_5 = arith.constant dense<0.000000e+00> : vector<64xf32>
    %16 = vector.multi_reduction <add>, %15, %cst_5 [0] : vector<16x64xf32> to vector<64xf32>
    %17 = vector.shape_cast %16 : vector<64xf32> to vector<1x64xf32>
    %18 = tpu.concatenate %14, %17 in 0 : vector<1x64xf32>, vector<1x64xf32> -> vector<2x64xf32>
    %19 = vector.shape_cast %18 : vector<2x64xf32> to vector<1x2x64xf32>
    %c0_6 = arith.constant 0 : index
    %c0_7 = arith.constant 0 : index
    %c0_8 = arith.constant 0 : index
    %20 = vector.load %arg3[%c0_6, %c0_7, %c0_8] : memref<1x2x64xf32, #tpu.memory_space<vmem>>, vector<1x2x64xf32>
    tpu.vector_store %arg3[%c0_6, %c0_7, %c0_8], %19 {strides = array<i32>} : memref<1x2x64xf32, #tpu.memory_space<vmem>>, vector<1x2x64xf32>,
    return
  }
  func.func @transform_0(%arg0: i32) -> (i32, i32) {
    %c0_i32 = arith.constant 0 : i32
    %c0_i32_0 = arith.constant 0 : i32
    return %arg0, %c0_i32 : i32, i32
  }
  func.func @transform_1(%arg0: i32) -> (i32, i32) {
    %c0_i32 = arith.constant 0 : i32
    %c0_i32_0 = arith.constant 0 : i32
    %c0_i32_1 = arith.constant 0 : i32
    return %c0_i32, %c0_i32_0 : i32, i32
  }
  func.func @transform_2(%arg0: i32) -> (i32, i32, i32) {
    %c0_i32 = arith.constant 0 : i32
    %c0_i32_0 = arith.constant 0 : i32
    %c0_i32_1 = arith.constant 0 : i32
    return %arg0, %c0_i32, %c0_i32_0 : i32, i32, i32
  }
}

module attributes {stable_mosaic.version = 11 : i64} {
  func.func @_fused_out_kernel(%arg0: i32, %arg1: memref<16x32xf32, #tpu.memory_space<vmem>>, %arg2: memref<32x64xf32, #tpu.memory_space<vmem>>, %arg3: memref<1x64xf32, #tpu.memory_space<vmem>>, %arg4: memref<1x64xf32, #tpu.memory_space<vmem>>, %arg5: memref<16x64xf32, #tpu.memory_space<vmem>>) attributes {dimension_semantics = [#tpu.dimension_semantics<parallel>], iteration_bounds = array<i64: 2>, scalar_prefetch = 0 : i64, scratch_operands = 0 : i64, tpu.core_type = #tpu.core_type<tc>, window_params = [{transform_indices = @transform_0, window_bounds = array<i64: 16, 32>}, {pipeline_mode = #tpu.pipeline_mode<synchronous>, transform_indices = @transform_1, window_bounds = array<i64: 32, 64>}, {pipeline_mode = #tpu.pipeline_mode<synchronous>, transform_indices = @transform_2, window_bounds = array<i64: 1, 64>}, {pipeline_mode = #tpu.pipeline_mode<synchronous>, transform_indices = @transform_3, window_bounds = array<i64: 1, 64>}, {transform_indices = @transform_4, window_bounds = array<i64: 16, 64>}]} {
    %c0 = arith.constant 0 : index
    %c0_0 = arith.constant 0 : index
    %0 = vector.load %arg1[%c0, %c0_0] : memref<16x32xf32, #tpu.memory_space<vmem>>, vector<16x32xf32>
    %c0_1 = arith.constant 0 : index
    %c0_2 = arith.constant 0 : index
    %1 = vector.load %arg2[%c0_1, %c0_2] : memref<32x64xf32, #tpu.memory_space<vmem>>, vector<32x64xf32>
    %cst = arith.constant dense<0.000000e+00> : vector<16x64xf32>
    %2 = tpu.matmul %0, %1, %cst {dimension_numbers = #tpu.dot_dimension_numbers<[1], [0], [0], [1], [0, 0, 1, 1], [], []>} : vector<16x32xf32>, vector<32x64xf32>, vector<16x64xf32> -> vector<16x64xf32>
    %c0_3 = arith.constant 0 : index
    %c0_4 = arith.constant 0 : index
    %3 = vector.load %arg3[%c0_3, %c0_4] : memref<1x64xf32, #tpu.memory_space<vmem>>, vector<1x64xf32>
    %4 = vector.broadcast %3 : vector<1x64xf32> to vector<16x64xf32>
    %5 = arith.mulf %2, %4 : vector<16x64xf32>
    %c0_5 = arith.constant 0 : index
    %c0_6 = arith.constant 0 : index
    %6 = vector.load %arg4[%c0_5, %c0_6] : memref<1x64xf32, #tpu.memory_space<vmem>>, vector<1x64xf32>
    %7 = vector.broadcast %6 : vector<1x64xf32> to vector<16x64xf32>
    %8 = arith.addf %5, %7 : vector<16x64xf32>
    %cst_7 = arith.constant 0.000000e+00 : f32
    %9 = vector.broadcast %cst_7 : f32 to vector<16x64xf32>
    %10 = arith.maximumf %8, %9 : vector<16x64xf32>
    %c0_8 = arith.constant 0 : index
    %c0_9 = arith.constant 0 : index
    %11 = vector.load %arg5[%c0_8, %c0_9] : memref<16x64xf32, #tpu.memory_space<vmem>>, vector<16x64xf32>
    tpu.vector_store %arg5[%c0_8, %c0_9], %10 {strides = array<i32>} : memref<16x64xf32, #tpu.memory_space<vmem>>, vector<16x64xf32>,
    return
  }
  func.func @transform_0(%arg0: i32) -> (i32, i32) {
    %c0_i32 = arith.constant 0 : i32
    %c0_i32_0 = arith.constant 0 : i32
    return %arg0, %c0_i32 : i32, i32
  }
  func.func @transform_1(%arg0: i32) -> (i32, i32) {
    %c0_i32 = arith.constant 0 : i32
    %c0_i32_0 = arith.constant 0 : i32
    %c0_i32_1 = arith.constant 0 : i32
    return %c0_i32, %c0_i32_0 : i32, i32
  }
  func.func @transform_2(%arg0: i32) -> (i32, i32) {
    %c0_i32 = arith.constant 0 : i32
    %c0_i32_0 = arith.constant 0 : i32
    %c0_i32_1 = arith.constant 0 : i32
    return %c0_i32, %c0_i32_0 : i32, i32
  }
  func.func @transform_3(%arg0: i32) -> (i32, i32) {
    %c0_i32 = arith.constant 0 : i32
    %c0_i32_0 = arith.constant 0 : i32
    %c0_i32_1 = arith.constant 0 : i32
    return %c0_i32, %c0_i32_0 : i32, i32
  }
  func.func @transform_4(%arg0: i32) -> (i32, i32) {
    %c0_i32 = arith.constant 0 : i32
    %c0_i32_0 = arith.constant 0 : i32
    return %arg0, %c0_i32 : i32, i32
  }
}

</mosaic_0001>

<llo_original>
// kernel: _point_lbr_impl.3
$region0: #{_point_lbr_impl.3}
  #allocation0 [shape = 'u32[]', space=smem, size = 0x4, offset = 0x4, fixed_abs, tag = 'smem constant byte address 0x4 - core index']
  #allocation1 [shape = 'u32[144,128]{1,0:T(1,128)}', space=vmem, size = 0x12000, scoped, tag = 'internal scratch']
  %s0 = inlined_call_operand.vmem [shape: f32[32,32], index: 0, kind: input, shape index: {}]
  %s1 = inlined_call_operand.vmem [shape: f32[32,64], index: 1, kind: input, shape index: {}]
  %s2 = inlined_call_operand.vmem [shape: f32[1,64], index: 2, kind: input, shape index: {}]
  %s3 = inlined_call_operand.vmem [shape: f32[1,64], index: 3, kind: input, shape index: {}]
  %s4 = inlined_call_operand.hbm [shape: f32[32,64], index: 4, kind: output, shape index: {}]
  %s5 = sld [smem:[#allocation0]]
  $region49: #{_point_lbr_impl.3} parent=0
    _
  %s7 = ssub.s32 1, %s5
  %s8 = scalar_select 0, %s7, %s5
  $region1: #{_point_lbr_impl.3} parent=0
    #allocation2 [shape = 'u8[16384]{0}', space=vmem, size = 0x4000, scoped, tag = 'output window, operand 0']
    #allocation3 [shape = 's32[2]{0}', space=sflag, size = 0x8, scoped, tag = 'scoped memory for _point_lbr_impl.3']
    %9 = vsyncpa [#allocation3], 0
    %s10 = scalar_lea.sflag [#allocation3], 1
    %11 = vsyncpa %s10, 0
    loop: start=0, step=1, limit=4
    $region2: #{_point_lbr_impl.3} parent=1 // loop_pre_header
      _
    $region3: #{_point_lbr_impl.3} parent=1 // loop_header
      %s13 = sphi 0, %s17
      %p14 = scmp.ge.s32.totalorder %s13, 4
      %s23 = sphi 0, %s25
      %s26 = sphi 0, %s23
      %s27 = sphi 0, %s26
      %s43 = sphi 0, %s27
      %s47 = sphi 0, %s47
      %s49 = sphi 0, %s47
      %s50 = sphi 0, %s49
      %s64 = sphi 0, %s50
      %s68 = sphi 0, %s68
      %s70 = sphi 0, %s68
      %s71 = sphi 0, %s70
      %s85 = sphi 0, %s71
      %s89 = sphi 0, %s89
      %s91 = sphi 0, %s89
      %s92 = sphi 0, %s91
      %s106 = sphi 0, %s92
      %s112 = sphi 0, %s114
      %s115 = sphi 0, %s112
      %s116 = sphi 0, %s115
      %s132 = sphi 0, %s116
    $region4: #{_point_lbr_impl.3} parent=1 // loop_header_branch
      %16 = sbr.rel (%p14) target = $region8
    $region5: #{_point_lbr_impl.3} parent=1 // loop_body
      %s18 = ssub.s32 %s13, 1
      %s19 = ssub.s32 %s13, 2
      %s20 = sadd.s32 %s13, 1
      %s21 = ssub.s32 %s13, %s20
      %p22 = scmp.eq.s32.totalorder %s21, 0
      %s24 = sadd.s32 %s23, 1
      %s25 = scalar_select %p22, %s23, %s24
      %p28 = pneg %p22
      %p29 = scmp.eq.s32.totalorder %s13, 1
      %p30 = por %p28, %p29
      %p31 = scmp.ne.s32.totalorder %s23, %s26
      %p32 = scmp.eq.s32.totalorder %s13, 0
      %p33 = por %p31, %p32
      %p34 = scmp.ne.s32.totalorder %s23, %s26
      %p35 = scmp.eq.s32.totalorder %s18, 1
      %p36 = por %p34, %p35
      %p37 = scmp.ne.s32.totalorder %s26, %s27
      %p38 = scmp.eq.s32.totalorder %s18, 0
      %p39 = por %p37, %p38
      %p40 = scmp.ne.s32.totalorder %s26, %s27
      %p41 = scmp.eq.s32.totalorder %s19, 1
      %p42 = por %p40, %p41
      %p44 = scmp.ne.s32.totalorder %s27, %s43
      %p45 = scmp.eq.s32.totalorder %s19, 0
      %p46 = por %p44, %p45
      %s48 = sadd.s32 %s47, 1
      %p51 = scmp.eq.s32.totalorder %s13, 1
      %p52 = scmp.ne.s32.totalorder %s47, %s49
      %p53 = scmp.eq.s32.totalorder %s13, 0
      %p54 = por %p52, %p53
      %p55 = scmp.ne.s32.totalorder %s47, %s49
      %p56 = scmp.eq.s32.totalorder %s18, 1
      %p57 = por %p55, %p56
      %p58 = scmp.ne.s32.totalorder %s49, %s50
      %p59 = scmp.eq.s32.totalorder %s18, 0
      %p60 = por %p58, %p59
      %p61 = scmp.ne.s32.totalorder %s49, %s50
      %p62 = scmp.eq.s32.totalorder %s19, 1
      %p63 = por %p61, %p62
      %p65 = scmp.ne.s32.totalorder %s50, %s64
      %p66 = scmp.eq.s32.totalorder %s19, 0
      %p67 = por %p65, %p66
      %s69 = sadd.s32 %s68, 1
      %p72 = scmp.eq.s32.totalorder %s13, 1
      %p73 = scmp.ne.s32.totalorder %s68, %s70
      %p74 = scmp.eq.s32.totalorder %s13, 0
      %p75 = por %p73, %p74
      %p76 = scmp.ne.s32.totalorder %s68, %s70
      %p77 = scmp.eq.s32.totalorder %s18, 1
      %p78 = por %p76, %p77
      %p79 = scmp.ne.s32.totalorder %s70, %s71
      %p80 = scmp.eq.s32.totalorder %s18, 0
      %p81 = por %p79, %p80
      %p82 = scmp.ne.s32.totalorder %s70, %s71
      %p83 = scmp.eq.s32.totalorder %s19, 1
      %p84 = por %p82, %p83
      %p86 = scmp.ne.s32.totalorder %s71, %s85
      %p87 = scmp.eq.s32.totalorder %s19, 0
      %p88 = por %p86, %p87
      %s90 = sadd.s32 %s89, 1
      %p93 = scmp.eq.s32.totalorder %s13, 1
      %p94 = scmp.ne.s32.totalorder %s89, %s91
      %p95 = scmp.eq.s32.totalorder %s13, 0
      %p96 = por %p94, %p95
      %p97 = scmp.ne.s32.totalorder %s89, %s91
      %p98 = scmp.eq.s32.totalorder %s18, 1
      %p99 = por %p97, %p98
      %p100 = scmp.ne.s32.totalorder %s91, %s92
      %p101 = scmp.eq.s32.totalorder %s18, 0
      %p102 = por %p100, %p101
      %p103 = scmp.ne.s32.totalorder %s91, %s92
      %p104 = scmp.eq.s32.totalorder %s19, 1
      %p105 = por %p103, %p104
      %p107 = scmp.ne.s32.totalorder %s92, %s106
      %p108 = scmp.eq.s32.totalorder %s19, 0
      %p109 = por %p107, %p108
      %s110 = ssub.s32 %s13, %s20
      %p111 = scmp.eq.s32.totalorder %s110, 0
      %s113 = sadd.s32 %s112, 1
      %s114 = scalar_select %p111, %s112, %s113
      %p117 = pneg %p111
      %p118 = scmp.eq.s32.totalorder %s13, 1
      %p119 = por %p117, %p118
      %p120 = scmp.ne.s32.totalorder %s112, %s115
      %p121 = scmp.eq.s32.totalorder %s13, 0
      %p122 = por %p120, %p121
      %p123 = scmp.ne.s32.totalorder %s112, %s115
      %p124 = scmp.eq.s32.totalorder %s18, 1
      %p125 = por %p123, %p124
      %p126 = scmp.ne.s32.totalorder %s115, %s116
      %p127 = scmp.eq.s32.totalorder %s18, 0
      %p128 = por %p126, %p127
      %p129 = scmp.ne.s32.totalorder %s115, %s116
      %p130 = scmp.eq.s32.totalorder %s19, 1
      %p131 = por %p129, %p130
      %p133 = scmp.ne.s32.totalorder %s116, %s132
      %p134 = scmp.eq.s32.totalorder %s19, 0
      %p135 = por %p133, %p134
      %p136 = scmp.le.s32.totalorder 1, %s13
      %p137 = scmp.lt.s32.totalorder %s13, 3
      %p138 = pnand %p136, %p137
      %p139 = pneg %p138
      // Predicated region
      $region9: #{_point_lbr_impl.3} parent=5 // pred_check
        _
      $region10: #{_point_lbr_impl.3} parent=5 // pred_check_branch
        %141 = sbr.rel (%p138) target = $region12
      $region11: #{_point_lbr_impl.3} parent=5 // pred_region
        %s142 = ssub.s32 %s13, 1
        // Predicated region
        $region13: #{_point_lbr_impl.3} parent=11 // pred_check
          %p143 = pneg %p60
        $region14: #{_point_lbr_impl.3} parent=11 // pred_check_branch
          %145 = sbr.rel (%p143) target = $region16
        $region15: #{_point_lbr_impl.3} parent=11 // pred_region
          _
        $region16: #{_point_lbr_impl.3} parent=11 // pred_fallthru
          _
        // Predicated region
        $region17: #{_point_lbr_impl.3} parent=11 // pred_check
          %p146 = pneg %p81
        $region18: #{_point_lbr_impl.3} parent=11 // pred_check_branch
          %148 = sbr.rel (%p146) target = $region20
        $region19: #{_point_lbr_impl.3} parent=11 // pred_region
          _
        $region20: #{_point_lbr_impl.3} parent=11 // pred_fallthru
          _
        // Predicated region
        $region21: #{_point_lbr_impl.3} parent=11 // pred_check
          %p149 = pneg %p102
        $region22: #{_point_lbr_impl.3} parent=11 // pred_check_branch
          %151 = sbr.rel (%p149) target = $region24
        $region23: #{_point_lbr_impl.3} parent=11 // pred_region
          _
        $region24: #{_point_lbr_impl.3} parent=11 // pred_fallthru
          _
      $region12: #{_point_lbr_impl.3} parent=5 // pred_fallthru
        _
      %p152 = scmp.lt.s32.totalorder %s13, 2
      // Predicated region
      $region25: #{_point_lbr_impl.3} parent=5 // pred_check
        %p153 = pneg %p152
      $region26: #{_point_lbr_impl.3} parent=5 // pred_check_branch
        %155 = sbr.rel (%p153) target = $region28
      $region27: #{_point_lbr_impl.3} parent=5 // pred_region
        // Predicated region
        $region29: #{_point_lbr_impl.3} parent=27 // pred_check
          %p156 = pneg %p33
        $region30: #{_point_lbr_impl.3} parent=27 // pred_check_branch
          %158 = sbr.rel (%p156) target = $region32
        $region31: #{_point_lbr_impl.3} parent=27 // pred_region
          %s159 = smul.u32 2, %s13
          %p160 = scmp.lt.s32.totalorder %s159, 3
          %s161 = scalar_select %p160, %s159, 3
          %s162 = smul.addr %s161, 8
          %s163 = scalar_lea.vmem %s0, %s162
          %s164 = smul.u32 2, %s13
        $region32: #{_point_lbr_impl.3} parent=27 // pred_fallthru
          _
      $region28: #{_point_lbr_impl.3} parent=5 // pred_fallthru
        _
      %p165 = scmp.le.s32.totalorder 1, %s13
      %p166 = scmp.lt.s32.totalorder %s13, 3
      %p167 = pnand %p165, %p166
      %p168 = pneg %p167
      // Predicated region
      $region33: #{_point_lbr_impl.3} parent=5 // pred_check
        _
      $region34: #{_point_lbr_impl.3} parent=5 // pred_check_branch
        %170 = sbr.rel (%p167) target = $region36
      $region35: #{_point_lbr_impl.3} parent=5 // pred_region
        %s171 = ssub.s32 %s13, 1
        %s172 = smul.u32 2, %s18
        %p173 = scmp.lt.s32.totalorder %s172, 3
        %s174 = scalar_select %p173, %s172, 3
        %s175 = smul.addr %s174, 8
        %s176 = scalar_lea.vmem %s0, %s175
        %p177 = pneg %p39
        %p178 = pneg %p36
        %p179 = pneg %p60
        %p180 = pneg %p57
        %p181 = pneg %p81
        %p182 = pneg %p78
        %p183 = pneg %p102
        %p184 = pneg %p99
        %p185 = pneg %p128
        %p186 = pneg %p125
        %s187 = sand.u32 %s115, 1
        %s188 = scalar_lea.sflag [#allocation3], %s187
        %s189 = sand.u32 %s115, 1
        %s190 = smul.addr %s189, 16
        %s191 = scalar_lea.vmem [#allocation2], %s190
        %s192 = smul.u32 2, %s18
        %p193 = scmp.lt.s32.totalorder %s192, 3
        %s194 = scalar_select %p193, %s192, 3
        %s195 = smul.addr %s194, 8
        %s196 = scalar_lea.vmem %s0, %s195
        %s197 = smul.u32 2, %s18
        %s198 = smul.u32 2, %s18
        %v199 = vld [vmem:[%s196] sm:$0xff]
        %v200 = vld [vmem:[%s196 + $0x8] sm:$0xff]
        %v201 = vld [vmem:[%s1] sm:$0xff]
        %v202 = vld [vmem:[%s1 + $0x8] sm:$0xff]
        %v203 = vld [vmem:[%s1 + $0x10] sm:$0xff]
        %v204 = vld [vmem:[%s1 + $0x18] sm:$0xff]
        %vm205 = vcmask 261120
        %v207 = vsel %vm205, %v199, 0
        %v210 = vsel %vm205, %v200, 0
        %212 = vmatprep.subr.mxu0 0.0
        %213 = vmatpush1.msra.mxu0 0.0
        %214 = vmatprep.subr.mxu0 0.0
        %215 = vmatpush1.msra.mxu0 0.0
        %216 = vmatprep.subr.mxu0 0.0
        %217 = vmatpush1.msra.mxu0 0.0
        %218 = vmatprep.subr.mxu0 0.0
        %219 = vmatpush1.msra.mxu0 0.0
        %220 = vmatprep.subr.mxu0 0.0
        %221 = vmatpush1.msra.mxu0 0.0
        %222 = vmatprep.subr.mxu0 0.0
        %223 = vmatpush1.msra.mxu0 0.0
        %224 = vmatprep.subr.mxu0 0.0
        %225 = vmatpush1.msra.mxu0 0.0
        %226 = vmatprep.subr.mxu0 0.0
        %227 = vmatpush1.msra.mxu0 0.0
        %228 = vmatprep.subr.mxu0 0.0
        %229 = vmatpush1.msra.mxu0 0.0
        %230 = vmatprep.subr.mxu0 0.0
        %231 = vmatpush1.msra.mxu0 0.0
        %232 = vmatprep.subr.mxu0 0.0
        %233 = vmatpush1.msra.mxu0 0.0
        %234 = vmatprep.subr.mxu0 0.0
        %235 = vmatpush1.msra.mxu0 0.0
        %236 = vmatprep.subr.mxu0 0.0
        %237 = vmatpush1.msra.mxu0 %v204
        %238 = vmatprep.subr.mxu0 0.0
        %239 = vmatpush1.msra.mxu0 %v203
        %240 = vmatprep.subr.mxu0 0.0
        %241 = vmatpush1.msra.mxu0 %v202
        %242 = vmatprep.subr.mxu0 0.0
        %243 = vmatpush1.msra.mxu0 %v201
        %244 = vmatprep.subr.mxu0 0.0
        %245 = vmatpush2.msra.mxu0 0.0
        %246 = vmatprep.subr.mxu0 0.0
        %247 = vmatpush2.msra.mxu0 0.0
        %248 = vmatprep.subr.mxu0 0.0
        %249 = vmatpush2.msra.mxu0 0.0
        %250 = vmatprep.subr.mxu0 0.0
        %251 = vmatpush2.msra.mxu0 0.0
        %252 = vmatprep.subr.mxu0 0.0
        %253 = vmatpush2.msra.mxu0 0.0
        %254 = vmatprep.subr.mxu0 0.0
        %255 = vmatpush2.msra.mxu0 0.0
        %256 = vmatprep.subr.mxu0 0.0
        %257 = vmatpush2.msra.mxu0 0.0
        %258 = vmatprep.subr.mxu0 0.0
        %259 = vmatpush2.msra.mxu0 0.0
        %260 = vmatprep.subr.mxu0 0.0
        %261 = vmatpush2.msra.mxu0 0.0
        %262 = vmatprep.subr.mxu0 0.0
        %263 = vmatpush2.msra.mxu0 0.0
        %264 = vmatprep.subr.mxu0 0.0
        %265 = vmatpush2.msra.mxu0 0.0
        %266 = vmatprep.subr.mxu0 0.0
        %267 = vmatpush2.msra.mxu0 0.0
        %268 = vmatprep.subr.mxu0 0.0
        %269 = vmatpush2.msra.mxu0 0.0
        %270 = vmatprep.subr.mxu0 0.0
        %271 = vmatpush2.msra.mxu0 0.0
        %272 = vmatprep.subr.mxu0 0.0
        %273 = vmatpush2.msra.mxu0 0.0
        %274 = vmatprep.subr.mxu0 0.0
        %275 = vmatpush2.msra.mxu0 0.0
        %276 = vmatprep.mubr.f32.mxu0 0.0
        %277 = vmatmul.mubr.f32.gmra.mxu0 %v207
        %v278 = vpop.f32.mrf.mxu0
        %v279 = vadd.f32 0.0, %v278
        %v280 = vpop.f32.mrf.mxu0
        %281 = vmatprep.mubr.f32.mxu0 0.0
        %282 = vmatmul.mubr.f32.gmra.mxu0 %v210
        %v283 = vpop.f32.mrf.mxu0
        %v284 = vadd.f32 0.0, %v283
        %v285 = vpop.f32.mrf.mxu0
        %286 = vdwg.mxu0
        %v287 = vld [vmem:[%s2] sm:$0x1]
        %v289 = vlaneseq
        %v290 = vshrl.u32 %v289, 7
        %v291 = vsub.s32 0, %v290
        %v292 = vrot.slane %v287, %v291
        %v294 = vmul.f32 %v279, %v292
        %v295 = vmul.f32 %v284, %v292
        %v296 = vld [vmem:[%s3] sm:$0x1]
        %v298 = vlaneseq
        %v299 = vshrl.u32 %v298, 7
        %v300 = vsub.s32 0, %v299
        %v301 = vrot.slane %v296, %v300
        %v303 = vadd.f32 %v294, %v301
        %v304 = vadd.f32 %v295, %v301
        %v305 = vmax.f32 %v303, 0.0
        %v306 = vmax.f32 %v304, 0.0
        %vm307 = vcmask 523264
        %308 = vst.msk [vmem:[%s191] sm:$0xff] %vm307, %v305
        %309 = vst.msk [vmem:[%s191 + $0x8] sm:$0xff] %vm307, %v306
        %s310 = sand.u32 %s115, 1
        %s311 = scalar_lea.sflag [#allocation3], %s310
        %s312 = sand.u32 %s115, 1
        %s313 = smul.addr %s312, 16
        %s314 = scalar_lea.vmem [#allocation2], %s313
        // Predicated region
        $region37: #{_point_lbr_impl.3} parent=35 // pred_check
          %p315 = pneg %p125
        $region38: #{_point_lbr_impl.3} parent=35 // pred_check_branch
          %317 = sbr.rel (%p315) target = $region40
        $region39: #{_point_lbr_impl.3} parent=35 // pred_region
          %s318 = smul.u32 2, %s18
          %s320 = ssub.s32 256, 256
          %321 = vsyncadd %s311, %s320
          %s322 = smul.addr %s318, 128
          %s323 = scalar_lea.hbm %s4, %s322
          %s324 = sshll.u32 %s314, 4
          %s325 = int_to_ptr.vmem [resolvable:$true] %s324
          %330 = dma.vmem_to_hbm [thread:$0]  %s325, 256, %s323, %s311, 128, 128, 8
        $region40: #{_point_lbr_impl.3} parent=35 // pred_fallthru
          _
      $region36: #{_point_lbr_impl.3} parent=5 // pred_fallthru
        _
      %p331 = scmp.le.s32.totalorder 2, %s13
      // Predicated region
      $region41: #{_point_lbr_impl.3} parent=5 // pred_check
        %p332 = pneg %p331
      $region42: #{_point_lbr_impl.3} parent=5 // pred_check_branch
        %334 = sbr.rel (%p332) target = $region44
      $region43: #{_point_lbr_impl.3} parent=5 // pred_region
        %s335 = ssub.s32 %s13, 2
        // Predicated region
        $region45: #{_point_lbr_impl.3} parent=43 // pred_check
          %p336 = pneg %p131
        $region46: #{_point_lbr_impl.3} parent=43 // pred_check_branch
          %338 = sbr.rel (%p336) target = $region48
        $region47: #{_point_lbr_impl.3} parent=43 // pred_region
          %s339 = sand.u32 %s116, 1
          %s340 = scalar_lea.sflag [#allocation3], %s339
          %s341 = sand.u32 %s116, 1
          %s342 = smul.addr %s341, 16
          %s343 = scalar_lea.vmem [#allocation2], %s342
          %344 = dma.done %s340, 256
        $region48: #{_point_lbr_impl.3} parent=43 // pred_fallthru
          _
      $region44: #{_point_lbr_impl.3} parent=5 // pred_fallthru
        _
    $region6: #{_point_lbr_impl.3} parent=1 // loop_footer
      %s17 = sadd.s32 1, %s13
    $region7: #{_point_lbr_impl.3} parent=1 // loop_footer_branch
      %12 = sbr.rel target = $region3
    $region8: #{_point_lbr_impl.3} parent=1 // loop_exit
      _
    %345 = vsyncpa [#allocation3], 1
    %s346 = scalar_lea.sflag [#allocation3], 1
    %347 = vsyncpa %s346, 1

// kernel: _point_lbr_impl.2
$region0: #{_point_lbr_impl.2}
  #allocation0 [shape = 'u32[]', space=smem, size = 0x4, offset = 0x4, fixed_abs, tag = 'smem constant byte address 0x4 - core index']
  #allocation1 [shape = 'u32[144,128]{1,0:T(1,128)}', space=vmem, size = 0x12000, scoped, tag = 'internal scratch']
  %s0 = inlined_call_operand.hbm [shape: f32[32,32], index: 0, kind: input, shape index: {}]
  %s1 = inlined_call_operand.hbm [shape: f32[32,64], index: 1, kind: input, shape index: {}]
  %s2 = inlined_call_operand.vmem [shape: f32[2,2,64], index: 2, kind: output, shape index: {}]
  %s3 = sld [smem:[#allocation0]]
  $region49: #{_point_lbr_impl.2} parent=0
    _
  %s5 = ssub.s32 1, %s3
  %s6 = scalar_select 0, %s5, %s3
  $region1: #{_point_lbr_impl.2} parent=0
    #allocation2 [shape = 'u8[16384]{0}', space=vmem, size = 0x4000, scoped, tag = 'input window, operand 0']
    #allocation3 [shape = 's32[2]{0}', space=sflag, size = 0x8, scoped, tag = 'scoped memory for _point_lbr_impl.2']
    #allocation4 [shape = 'u8[16384]{0}', space=vmem, size = 0x4000, scoped, tag = 'input window, operand 1, single buffered']
    #allocation5 [shape = 's32[1]{0}', space=sflag, size = 0x4, scoped, tag = 'scoped memory for _point_lbr_impl.2']
    %7 = vsyncpa [#allocation3], 0
    %s8 = scalar_lea.sflag [#allocation3], 1
    %9 = vsyncpa %s8, 0
    %10 = vsyncpa [#allocation5], 0
    loop: start=0, step=1, limit=4
    $region2: #{_point_lbr_impl.2} parent=1 // loop_pre_header
      _
    $region3: #{_point_lbr_impl.2} parent=1 // loop_header
      %s12 = sphi 0, %s16
      %p13 = scmp.ge.s32.totalorder %s12, 4
      %s22 = sphi 0, %s24
      %s25 = sphi 0, %s22
      %s26 = sphi 0, %s25
      %s42 = sphi 0, %s26
      %s46 = sphi 0, %s46
      %s48 = sphi 0, %s46
      %s49 = sphi 0, %s48
      %s63 = sphi 0, %s49
      %s69 = sphi 0, %s71
      %s72 = sphi 0, %s69
      %s73 = sphi 0, %s72
      %s89 = sphi 0, %s73
    $region4: #{_point_lbr_impl.2} parent=1 // loop_header_branch
      %15 = sbr.rel (%p13) target = $region8
    $region5: #{_point_lbr_impl.2} parent=1 // loop_body
      %s17 = ssub.s32 %s12, 1
      %s18 = ssub.s32 %s12, 2
      %s19 = sadd.s32 %s12, 1
      %s20 = ssub.s32 %s12, %s19
      %p21 = scmp.eq.s32.totalorder %s20, 0
      %s23 = sadd.s32 %s22, 1
      %s24 = scalar_select %p21, %s22, %s23
      %p27 = pneg %p21
      %p28 = scmp.eq.s32.totalorder %s12, 1
      %p29 = por %p27, %p28
      %p30 = scmp.ne.s32.totalorder %s22, %s25
      %p31 = scmp.eq.s32.totalorder %s12, 0
      %p32 = por %p30, %p31
      %p33 = scmp.ne.s32.totalorder %s22, %s25
      %p34 = scmp.eq.s32.totalorder %s17, 1
      %p35 = por %p33, %p34
      %p36 = scmp.ne.s32.totalorder %s25, %s26
      %p37 = scmp.eq.s32.totalorder %s17, 0
      %p38 = por %p36, %p37
      %p39 = scmp.ne.s32.totalorder %s25, %s26
      %p40 = scmp.eq.s32.totalorder %s18, 1
      %p41 = por %p39, %p40
      %p43 = scmp.ne.s32.totalorder %s26, %s42
      %p44 = scmp.eq.s32.totalorder %s18, 0
      %p45 = por %p43, %p44
      %s47 = sadd.s32 %s46, 1
      %p50 = scmp.eq.s32.totalorder %s12, 1
      %p51 = scmp.ne.s32.totalorder %s46, %s48
      %p52 = scmp.eq.s32.totalorder %s12, 0
      %p53 = por %p51, %p52
      %p54 = scmp.ne.s32.totalorder %s46, %s48
      %p55 = scmp.eq.s32.totalorder %s17, 1
      %p56 = por %p54, %p55
      %p57 = scmp.ne.s32.totalorder %s48, %s49
      %p58 = scmp.eq.s32.totalorder %s17, 0
      %p59 = por %p57, %p58
      %p60 = scmp.ne.s32.totalorder %s48, %s49
      %p61 = scmp.eq.s32.totalorder %s18, 1
      %p62 = por %p60, %p61
      %p64 = scmp.ne.s32.totalorder %s49, %s63
      %p65 = scmp.eq.s32.totalorder %s18, 0
      %p66 = por %p64, %p65
      %s67 = ssub.s32 %s12, %s19
      %p68 = scmp.eq.s32.totalorder %s67, 0
      %s70 = sadd.s32 %s69, 1
      %s71 = scalar_select %p68, %s69, %s70
      %p74 = pneg %p68
      %p75 = scmp.eq.s32.totalorder %s12, 1
      %p76 = por %p74, %p75
      %p77 = scmp.ne.s32.totalorder %s69, %s72
      %p78 = scmp.eq.s32.totalorder %s12, 0
      %p79 = por %p77, %p78
      %p80 = scmp.ne.s32.totalorder %s69, %s72
      %p81 = scmp.eq.s32.totalorder %s17, 1
      %p82 = por %p80, %p81
      %p83 = scmp.ne.s32.totalorder %s72, %s73
      %p84 = scmp.eq.s32.totalorder %s17, 0
      %p85 = por %p83, %p84
      %p86 = scmp.ne.s32.totalorder %s72, %s73
      %p87 = scmp.eq.s32.totalorder %s18, 1
      %p88 = por %p86, %p87
      %p90 = scmp.ne.s32.totalorder %s73, %s89
      %p91 = scmp.eq.s32.totalorder %s18, 0
      %p92 = por %p90, %p91
      %p93 = scmp.le.s32.totalorder 1, %s12
      %p94 = scmp.lt.s32.totalorder %s12, 3
      %p95 = pnand %p93, %p94
      %p96 = pneg %p95
      // Predicated region
      $region9: #{_point_lbr_impl.2} parent=5 // pred_check
        _
      $region10: #{_point_lbr_impl.2} parent=5 // pred_check_branch
        %98 = sbr.rel (%p95) target = $region12
      $region11: #{_point_lbr_impl.2} parent=5 // pred_region
        %s99 = ssub.s32 %s12, 1
        // Predicated region
        $region13: #{_point_lbr_impl.2} parent=11 // pred_check
          %p100 = pneg %p59
        $region14: #{_point_lbr_impl.2} parent=11 // pred_check_branch
          %102 = sbr.rel (%p100) target = $region16
        $region15: #{_point_lbr_impl.2} parent=11 // pred_region
          %s104 = ssub.s32 512, 512
          %105 = vsyncadd [#allocation5], %s104
          %s106 = sshll.u32 [#allocation4], 4
          %s107 = int_to_ptr.vmem [resolvable:$true] %s106
          %112 = dma.hbm_to_vmem [thread:$0]  %s1, 512, %s107, [#allocation5], 128, 128, 8
        $region16: #{_point_lbr_impl.2} parent=11 // pred_fallthru
          _
      $region12: #{_point_lbr_impl.2} parent=5 // pred_fallthru
        _
      %p113 = scmp.lt.s32.totalorder %s12, 2
      // Predicated region
      $region17: #{_point_lbr_impl.2} parent=5 // pred_check
        %p114 = pneg %p113
      $region18: #{_point_lbr_impl.2} parent=5 // pred_check_branch
        %116 = sbr.rel (%p114) target = $region20
      $region19: #{_point_lbr_impl.2} parent=5 // pred_region
        // Predicated region
        $region21: #{_point_lbr_impl.2} parent=19 // pred_check
          %p117 = pneg %p32
        $region22: #{_point_lbr_impl.2} parent=19 // pred_check_branch
          %119 = sbr.rel (%p117) target = $region24
        $region23: #{_point_lbr_impl.2} parent=19 // pred_region
          %s120 = sand.u32 %s22, 1
          %s121 = scalar_lea.sflag [#allocation3], %s120
          %s122 = sand.u32 %s22, 1
          %s123 = smul.addr %s122, 16
          %s124 = scalar_lea.vmem [#allocation2], %s123
          %s125 = smul.u32 2, %s12
          %s127 = ssub.s32 256, 256
          %128 = vsyncadd %s121, %s127
          %s129 = smul.addr %s125, 128
          %s130 = scalar_lea.hbm %s0, %s129
          %s131 = sshll.u32 %s124, 4
          %s132 = int_to_ptr.vmem [resolvable:$true] %s131
          %137 = dma.hbm_to_vmem [thread:$0]  %s130, 256, %s132, %s121, 128, 128, 8
        $region24: #{_point_lbr_impl.2} parent=19 // pred_fallthru
          _
      $region20: #{_point_lbr_impl.2} parent=5 // pred_fallthru
        _
      %p138 = scmp.le.s32.totalorder 1, %s12
      %p139 = scmp.lt.s32.totalorder %s12, 3
      %p140 = pnand %p138, %p139
      %p141 = pneg %p140
      // Predicated region
      $region25: #{_point_lbr_impl.2} parent=5 // pred_check
        _
      $region26: #{_point_lbr_impl.2} parent=5 // pred_check_branch
        %143 = sbr.rel (%p140) target = $region28
      $region27: #{_point_lbr_impl.2} parent=5 // pred_region
        %s144 = ssub.s32 %s12, 1
        %s145 = sand.u32 %s25, 1
        %s146 = scalar_lea.sflag [#allocation3], %s145
        %s147 = sand.u32 %s25, 1
        %s148 = smul.addr %s147, 16
        %s149 = scalar_lea.vmem [#allocation2], %s148
        // Predicated region
        $region29: #{_point_lbr_impl.2} parent=27 // pred_check
          %p150 = pneg %p38
        $region30: #{_point_lbr_impl.2} parent=27 // pred_check_branch
          %152 = sbr.rel (%p150) target = $region32
        $region31: #{_point_lbr_impl.2} parent=27 // pred_region
          %153 = dma.done %s146, 256
        $region32: #{_point_lbr_impl.2} parent=27 // pred_fallthru
          _
        // Predicated region
        $region33: #{_point_lbr_impl.2} parent=27 // pred_check
          %p154 = pneg %p59
        $region34: #{_point_lbr_impl.2} parent=27 // pred_check_branch
          %156 = sbr.rel (%p154) target = $region36
        $region35: #{_point_lbr_impl.2} parent=27 // pred_region
          %157 = dma.done [#allocation5], 512
        $region36: #{_point_lbr_impl.2} parent=27 // pred_fallthru
          _
        %s158 = sand.u32 %s25, 1
        %s159 = scalar_lea.sflag [#allocation3], %s158
        %s160 = sand.u32 %s25, 1
        %s161 = smul.addr %s160, 16
        %s162 = scalar_lea.vmem [#allocation2], %s161
        %p163 = pneg %p38
        %p164 = pneg %p35
        %p165 = pneg %p59
        %p166 = pneg %p56
        %p167 = pneg %p85
        %p168 = pneg %p82
        %p169 = scmp.lt.s32.totalorder %s17, 1
        %s170 = scalar_select %p169, %s17, 1
        %s171 = smul.addr %s170, 2
        %s172 = scalar_lea.vmem %s2, %s171
        %s173 = smul.u32 2, %s17
        %p174 = scmp.lt.s32.totalorder %s17, 1
        %s175 = scalar_select %p174, %s17, 1
        %s176 = smul.addr %s175, 2
        %s177 = scalar_lea.vmem %s2, %s176
        %v178 = vld [vmem:[%s149] sm:$0xff]
        %v179 = vld [vmem:[%s149 + $0x8] sm:$0xff]
        %v180 = vld [vmem:[#allocation4] sm:$0xff]
        %v181 = vld [vmem:[#allocation4 + $0x8] sm:$0xff]
        %v182 = vld [vmem:[#allocation4 + $0x10] sm:$0xff]
        %v183 = vld [vmem:[#allocation4 + $0x18] sm:$0xff]
        %vm184 = vcmask 261120
        %v186 = vsel %vm184, %v178, 0
        %v189 = vsel %vm184, %v179, 0
        %191 = vmatprep.subr.mxu0 0.0
        %192 = vmatpush1.msra.mxu0 0.0
        %193 = vmatprep.subr.mxu0 0.0
        %194 = vmatpush1.msra.mxu0 0.0
        %195 = vmatprep.subr.mxu0 0.0
        %196 = vmatpush1.msra.mxu0 0.0
        %197 = vmatprep.subr.mxu0 0.0
        %198 = vmatpush1.msra.mxu0 0.0
        %199 = vmatprep.subr.mxu0 0.0
        %200 = vmatpush1.msra.mxu0 0.0
        %201 = vmatprep.subr.mxu0 0.0
        %202 = vmatpush1.msra.mxu0 0.0
        %203 = vmatprep.subr.mxu0 0.0
        %204 = vmatpush1.msra.mxu0 0.0
        %205 = vmatprep.subr.mxu0 0.0
        %206 = vmatpush1.msra.mxu0 0.0
        %207 = vmatprep.subr.mxu0 0.0
        %208 = vmatpush1.msra.mxu0 0.0
        %209 = vmatprep.subr.mxu0 0.0
        %210 = vmatpush1.msra.mxu0 0.0
        %211 = vmatprep.subr.mxu0 0.0
        %212 = vmatpush1.msra.mxu0 0.0
        %213 = vmatprep.subr.mxu0 0.0
        %214 = vmatpush1.msra.mxu0 0.0
        %215 = vmatprep.subr.mxu0 0.0
        %216 = vmatpush1.msra.mxu0 %v183
        %217 = vmatprep.subr.mxu0 0.0
        %218 = vmatpush1.msra.mxu0 %v182
        %219 = vmatprep.subr.mxu0 0.0
        %220 = vmatpush1.msra.mxu0 %v181
        %221 = vmatprep.subr.mxu0 0.0
        %222 = vmatpush1.msra.mxu0 %v180
        %223 = vmatprep.subr.mxu0 0.0
        %224 = vmatpush2.msra.mxu0 0.0
        %225 = vmatprep.subr.mxu0 0.0
        %226 = vmatpush2.msra.mxu0 0.0
        %227 = vmatprep.subr.mxu0 0.0
        %228 = vmatpush2.msra.mxu0 0.0
        %229 = vmatprep.subr.mxu0 0.0
        %230 = vmatpush2.msra.mxu0 0.0
        %231 = vmatprep.subr.mxu0 0.0
        %232 = vmatpush2.msra.mxu0 0.0
        %233 = vmatprep.subr.mxu0 0.0
        %234 = vmatpush2.msra.mxu0 0.0
        %235 = vmatprep.subr.mxu0 0.0
        %236 = vmatpush2.msra.mxu0 0.0
        %237 = vmatprep.subr.mxu0 0.0
        %238 = vmatpush2.msra.mxu0 0.0
        %239 = vmatprep.subr.mxu0 0.0
        %240 = vmatpush2.msra.mxu0 0.0
        %241 = vmatprep.subr.mxu0 0.0
        %242 = vmatpush2.msra.mxu0 0.0
        %243 = vmatprep.subr.mxu0 0.0
        %244 = vmatpush2.msra.mxu0 0.0
        %245 = vmatprep.subr.mxu0 0.0
        %246 = vmatpush2.msra.mxu0 0.0
        %247 = vmatprep.subr.mxu0 0.0
        %248 = vmatpush2.msra.mxu0 0.0
        %249 = vmatprep.subr.mxu0 0.0
        %250 = vmatpush2.msra.mxu0 0.0
        %251 = vmatprep.subr.mxu0 0.0
        %252 = vmatpush2.msra.mxu0 0.0
        %253 = vmatprep.subr.mxu0 0.0
        %254 = vmatpush2.msra.mxu0 0.0
        %255 = vmatprep.mubr.f32.mxu0 0.0
        %256 = vmatmul.mubr.f32.gmra.mxu0 %v186
        %v257 = vpop.f32.mrf.mxu0
        %v258 = vadd.f32 0.0, %v257
        %v259 = vpop.f32.mrf.mxu0
        %260 = vmatprep.mubr.f32.mxu0 0.0
        %261 = vmatmul.mubr.f32.gmra.mxu0 %v189
        %v262 = vpop.f32.mrf.mxu0
        %v263 = vadd.f32 0.0, %v262
        %v264 = vpop.f32.mrf.mxu0
        %265 = vdwg.mxu0
        %s266 = smul.u32 %s17, 16
        %v267 = vlaneseq
        %v268 = vshrl.u32 %v267, 7
        %v269 = vadd.s32 %v268, 8
        %v270 = vstv %s266
        %v271 = vadd.s32 %v270, %v268
        %v272 = vadd.s32 %v270, %v269
        %vm273 = vcmp.lt.s32.totalorder %v271, 32
        %vm274 = vcmp.lt.s32.totalorder %v272, 32
        %v275 = vsel %vm273, 1, 0
        %v276 = vsel %vm274, 1, 0
        %vm277 = vcmp.eq.s32.totalorder %v275, 1
        %vm278 = vcmp.eq.s32.totalorder %v276, 1
        %v279 = vsel %vm277, %v258, 0.0
        %v280 = vsel %vm278, %v263, 0.0
        %vm281 = vcmask 523264
        %v282 = vsel %vm281, %v279, 0.0
        %v283 = vsel %vm281, %v280, 0.0
        %v284 = vadd.f32 %v282, %v283
        %v285 = vrot.slane %v284, 4
        %v286 = vadd.f32 %v284, %v285
        %v287 = vrot.slane %v286, 2
        %v288 = vadd.f32 %v286, %v287
        %v289 = vrot.slane %v288, 1
        %v290 = vadd.f32 %v288, %v289
        %v291 = vmul.f32 %v279, %v279
        %v292 = vmul.f32 %v280, %v280
        %v293 = vsel %vm281, %v291, 0.0
        %v294 = vsel %vm281, %v292, 0.0
        %v295 = vadd.f32 %v293, %v294
        %v296 = vrot.slane %v295, 4
        %v297 = vadd.f32 %v295, %v296
        %v298 = vrot.slane %v297, 2
        %v299 = vadd.f32 %v297, %v298
        %v300 = vrot.slane %v299, 1
        %v301 = vadd.f32 %v299, %v300
        %vm302 = vcmask 1040384
        %v303 = vsel %vm302, %v290, %v301
        %vm304 = vcmask 517120
        %305 = vst.msk [vmem:[%s177] sm:$0x3] %vm304, %v303
        %p306 = scmp.lt.s32.totalorder %s17, 1
        %s307 = scalar_select %p306, %s17, 1
        %s308 = smul.addr %s307, 2
        %s309 = scalar_lea.vmem %s2, %s308
        // Predicated region
        $region37: #{_point_lbr_impl.2} parent=27 // pred_check
          %p310 = pneg %p82
        $region38: #{_point_lbr_impl.2} parent=27 // pred_check_branch
          %312 = sbr.rel (%p310) target = $region40
        $region39: #{_point_lbr_impl.2} parent=27 // pred_region
          _
        $region40: #{_point_lbr_impl.2} parent=27 // pred_fallthru
          _
      $region28: #{_point_lbr_impl.2} parent=5 // pred_fallthru
        _
      %p313 = scmp.le.s32.totalorder 2, %s12
      // Predicated region
      $region41: #{_point_lbr_impl.2} parent=5 // pred_check
        %p314 = pneg %p313
      $region42: #{_point_lbr_impl.2} parent=5 // pred_check_branch
        %316 = sbr.rel (%p314) target = $region44
      $region43: #{_point_lbr_impl.2} parent=5 // pred_region
        %s317 = ssub.s32 %s12, 2
        // Predicated region
        $region45: #{_point_lbr_impl.2} parent=43 // pred_check
          %p318 = pneg %p88
        $region46: #{_point_lbr_impl.2} parent=43 // pred_check_branch
          %320 = sbr.rel (%p318) target = $region48
        $region47: #{_point_lbr_impl.2} parent=43 // pred_region
          %p321 = scmp.lt.s32.totalorder %s18, 1
          %s322 = scalar_select %p321, %s18, 1
          %s323 = smul.addr %s322, 2
          %s324 = scalar_lea.vmem %s2, %s323
        $region48: #{_point_lbr_impl.2} parent=43 // pred_fallthru
          _
      $region44: #{_point_lbr_impl.2} parent=5 // pred_fallthru
        _
    $region6: #{_point_lbr_impl.2} parent=1 // loop_footer
      %s16 = sadd.s32 1, %s12
    $region7: #{_point_lbr_impl.2} parent=1 // loop_footer_branch
      %11 = sbr.rel target = $region3
    $region8: #{_point_lbr_impl.2} parent=1 // loop_exit
      _
    %325 = vsyncpa [#allocation3], 1
    %s326 = scalar_lea.sflag [#allocation3], 1
    %327 = vsyncpa %s326, 1
    %328 = vsyncpa [#allocation5], 1

</llo_original>
